<compile_context>
chip_gen: v6e
topology: v6e:2x2x1
jax: 0.10.0
libtpu: 0.0.40
codegen_flags: <defaults>
</compile_context>

<pallas_src>
import numpy as np
import jax
import jax.numpy as jnp
from jax.experimental import pallas as pl
from jax.experimental.pallas import tpu as pltpu

LANES = 128


def _l2_kernel(coef_ref, pos_ref, tgt_ref, dist_ref, world_ref):
    # Affine ScreenToWorld coefficients (SMEM scalars via scalar prefetch).
    C0 = coef_ref[0]; C1 = coef_ref[1]; C2 = coef_ref[2]
    D0 = coef_ref[3]; D1 = coef_ref[4]; D2 = coef_ref[5]
    E0 = coef_ref[6]; E1 = coef_ref[7]; E2 = coef_ref[8]
    z0 = coef_ref[9]

    Y = pos_ref[0]                      # (tr, 128)  == xy[:, 0]
    X = pos_ref[1]                      # (tr, 128)  == xy[:, 1]

    inv = pl.reciprocal(C0 + C1 * Y + C2 * X)        # exact recip, EUP slot
    x = (D0 + D1 * Y + D2 * X) * inv
    y = (E0 + E1 * Y + E2 * X) * inv                 # negation folded into E*

    # Fused world output (channel-major): x, y and the constant z0 channel.
    world_ref[0] = x
    world_ref[1] = y
    world_ref[2] = jnp.zeros_like(x) + z0

    dx = x - tgt_ref[0]
    dy = y - tgt_ref[1]
    dz = z0 - tgt_ref[2]
    dist_ref[...] = jnp.sqrt(dx * dx + dy * dy + dz * dz)


def l2_tracking_distance(position, target_position, camera_view_matrix,
                         zero_elevation, *, rows_per_tile=1024):
    """position: (B, 2) screen coords; target_position: (B, 3) world coords.
    Returns (distance (B,), world_position (B, 3)) — same as the torch module."""
    position = jnp.asarray(position, jnp.float32)
    target_position = jnp.asarray(target_position, jnp.float32)
    cam = jnp.asarray(camera_view_matrix, jnp.float32)
    z0 = jnp.float32(zero_elevation)

    a, b, c, d = cam[0, 0], cam[0, 1], cam[0, 2], cam[0, 3]
    e, f, g, h = cam[1, 0], cam[1, 1], cam[1, 2], cam[1, 3]
    m, n, o, p = cam[3, 0], cam[3, 1], cam[3, 2], cam[3, 3]

    # denom = C0 + C1*Y + C2*X ; xnum = D0 + D1*Y + D2*X ; ynum = E0 + E1*Y + E2*X
    # (E* carry the module's leading minus sign for y.)
    coef = jnp.stack([
        a * f - b * e, a * n - b * m, e * n - f * m,
        b * h - d * f + (b * g - c * f) * z0,
        b * p - d * n + (b * o - c * n) * z0,
        f * p - h * n + (f * o - g * n) * z0,
        -(a * h - d * e + (a * g - c * e) * z0),
        -(a * p - d * m + (a * o - c * m) * z0),
        -(e * p - h * m + (e * o - g * m) * z0),
        z0,
    ])

    B = position.shape[0]
    rows = -(-B // LANES)                          # ceil(B / 128)
    rows8 = ((rows + 7) // 8) * 8                  # pad rows only to sublane multiple
    Bp = rows8 * LANES

    # Tile rows: multiple of 8, capped so the grid has >= 2 steps when there is
    # enough work (v7x dual-TC), ragged last block handled by Pallas masking.
    half = ((-(-rows8 // 2) + 7) // 8) * 8
    tr = max(8, min(rows_per_tile, rows8, half))
    grid = -(-rows8 // tr)

    # Channel-major, lane-dense padded slabs.
    # TODO(synk): this repack is the dominant remaining HBM pass; keep inputs
    # channel-major upstream to remove it.
    pos_cm = jnp.pad(position.T, ((0, 0), (0, Bp - B))).reshape(2, rows8, LANES)
    tgt_cm = jnp.pad(target_position.T, ((0, 0), (0, Bp - B))).reshape(3, rows8, LANES)

    dist_p, world_p = pl.pallas_call(
        _l2_kernel,
        out_shape=(jax.ShapeDtypeStruct((rows8, LANES), jnp.float32),
                   jax.ShapeDtypeStruct((3, rows8, LANES), jnp.float32)),
        grid_spec=pltpu.PrefetchScalarGridSpec(
            num_scalar_prefetch=1,                              # coef -> SMEM once
            grid=(grid,),
            in_specs=[
                pl.BlockSpec((2, tr, LANES), lambda i, coef: (0, i, 0)),   # position
                pl.BlockSpec((3, tr, LANES), lambda i, coef: (0, i, 0)),   # target
            ],
            out_specs=(
                pl.BlockSpec((tr, LANES), lambda i, coef: (i, 0)),         # distance
                pl.BlockSpec((3, tr, LANES), lambda i, coef: (0, i, 0)),   # world xyz
            ),
        ),
        compiler_params=pltpu.CompilerParams(
            dimension_semantics=("parallel",)),
    )(coef, pos_cm, tgt_cm)

    dist = dist_p.reshape(-1)[:B]
    world = world_p.reshape(3, -1)[:, :B].T
    return dist, world


def _reference(position, target_position, cam, z0):
    """Pure numpy replica of the PyTorch forward, for verification."""
    cam = np.asarray(cam, np.float32)
    a, b, c, d = cam[0]
    e, f, g, h = cam[1]
    m, n, o, p = cam[3]
    X = np.asarray(position)[:, 1].astype(np.float32)
    Y = np.asarray(position)[:, 0].astype(np.float32)
    z = np.zeros_like(X) + np.float32(z0)
    denom = a * f - b * e + Y * a * n - Y * b * m + X * e * n - X * f * m
    x = (b * h - d * f + Y * b * p - Y * d * n + X * f * p - X * h * n
         + b * g * z - c * f * z + Y * b * o * z - Y * c * n * z
         + X * f * o * z - X * g * n * z) / denom
    y = -(a * h - d * e + Y * a * p - Y * d * m + X * e * p - X * h * m
          + a * g * z - c * e * z + Y * a * o * z - Y * c * m * z
          + X * e * o * z - X * g * m * z) / denom
    world = np.stack((x, y, z), axis=1)
    dist = np.sqrt(np.sum((world - np.asarray(target_position, np.float32)) ** 2, axis=1))
    return dist, world


def _check(B, key):
    k_pos, k_tgt = jax.random.split(key)
    position = jax.random.uniform(k_pos, (B, 2), jnp.float32)          # screen xy
    target_position = jax.random.normal(k_tgt, (B, 3), jnp.float32)    # world xyz

    dist, world = l2_tracking_distance(position, target_position,
                                       _CAM, _Z0)
    dist = jax.block_until_ready(dist)
    world = jax.block_until_ready(world)

    ref_dist, ref_world = _reference(np.asarray(position), np.asarray(target_position),
                                     _CAM, _Z0)
    assert dist.shape == (B,) and world.shape == (B, 3)
    assert np.allclose(np.asarray(dist), ref_dist, rtol=1e-5, atol=1e-5)
    assert np.allclose(np.asarray(world), ref_world, rtol=1e-5, atol=1e-5)


# Deterministic "module parameters" (camera view matrix + zero elevation).
_CAM = np.array(
    [[0.90, 0.10, 0.05, 0.20],
     [0.05, 0.80, -0.60, 0.30],
     [0.10, 0.60, 0.75, -4.00],
     [0.01, 0.02, 0.03, 1.00]], dtype=np.float32)
_Z0 = 0.5


if __name__ == "__main__":
    key = jax.random.PRNGKey(0)
    k_small, k_big = jax.random.split(key)

    # Small shape (B=8): single-tile path.
    _check(8, k_small)
    # Slightly larger batch: exercises >=2 grid steps and the ragged last block.
    _check(2500, k_big)

    print("KERNEL_OK")
</pallas_src>

<mosaic_0001>
module attributes {stable_mosaic.version = 11 : i64} {
  func.func @_l2_kernel(%arg0: i32, %arg1: memref<10xf32, #tpu.memory_space<smem>>, %arg2: memref<2x8x128xf32, #tpu.memory_space<vmem>>, %arg3: memref<3x8x128xf32, #tpu.memory_space<vmem>>, %arg4: memref<8x128xf32, #tpu.memory_space<vmem>>, %arg5: memref<3x8x128xf32, #tpu.memory_space<vmem>>) attributes {dimension_semantics = [#tpu.dimension_semantics<parallel>], iteration_bounds = array<i64: 1>, scalar_prefetch = 1 : i64, scratch_operands = 0 : i64, tpu.core_type = #tpu.core_type<tc>, window_params = [{transform_indices = @transform_0, window_bounds = array<i64: 2, 8, 128>}, {transform_indices = @transform_1, window_bounds = array<i64: 3, 8, 128>}, {transform_indices = @transform_2, window_bounds = array<i64: 8, 128>}, {transform_indices = @transform_3, window_bounds = array<i64: 3, 8, 128>}]} {
    %c0 = arith.constant 0 : index
    %0 = memref.load %arg1[%c0] : memref<10xf32, #tpu.memory_space<smem>>
    %c1 = arith.constant 1 : index
    %1 = memref.load %arg1[%c1] : memref<10xf32, #tpu.memory_space<smem>>
    %c2 = arith.constant 2 : index
    %2 = memref.load %arg1[%c2] : memref<10xf32, #tpu.memory_space<smem>>
    %c3 = arith.constant 3 : index
    %3 = memref.load %arg1[%c3] : memref<10xf32, #tpu.memory_space<smem>>
    %c4 = arith.constant 4 : index
    %4 = memref.load %arg1[%c4] : memref<10xf32, #tpu.memory_space<smem>>
    %c5 = arith.constant 5 : index
    %5 = memref.load %arg1[%c5] : memref<10xf32, #tpu.memory_space<smem>>
    %c6 = arith.constant 6 : index
    %6 = memref.load %arg1[%c6] : memref<10xf32, #tpu.memory_space<smem>>
    %c7 = arith.constant 7 : index
    %7 = memref.load %arg1[%c7] : memref<10xf32, #tpu.memory_space<smem>>
    %c8 = arith.constant 8 : index
    %8 = memref.load %arg1[%c8] : memref<10xf32, #tpu.memory_space<smem>>
    %c9 = arith.constant 9 : index
    %9 = memref.load %arg1[%c9] : memref<10xf32, #tpu.memory_space<smem>>
    %c0_0 = arith.constant 0 : index
    %c0_1 = arith.constant 0 : index
    %c0_2 = arith.constant 0 : index
    %10 = vector.load %arg2[%c0_0, %c0_1, %c0_2] : memref<2x8x128xf32, #tpu.memory_space<vmem>>, vector<1x8x128xf32>
    %11 = vector.shape_cast %10 : vector<1x8x128xf32> to vector<8x128xf32>
    %c1_3 = arith.constant 1 : index
    %c0_4 = arith.constant 0 : index
    %c0_5 = arith.constant 0 : index
    %12 = vector.load %arg2[%c1_3, %c0_4, %c0_5] : memref<2x8x128xf32, #tpu.memory_space<vmem>>, vector<1x8x128xf32>
    %13 = vector.shape_cast %12 : vector<1x8x128xf32> to vector<8x128xf32>
    %14 = vector.broadcast %1 : f32 to vector<8x128xf32>
    %15 = arith.mulf %14, %11 : vector<8x128xf32>
    %16 = vector.broadcast %0 : f32 to vector<8x128xf32>
    %17 = arith.addf %16, %15 : vector<8x128xf32>
    %18 = vector.broadcast %2 : f32 to vector<8x128xf32>
    %19 = arith.mulf %18, %13 : vector<8x128xf32>
    %20 = arith.addf %17, %19 : vector<8x128xf32>
    %21 = tpu.reciprocal %20 : vector<8x128xf32> -> vector<8x128xf32>
    %22 = vector.broadcast %4 : f32 to vector<8x128xf32>
    %23 = arith.mulf %22, %11 : vector<8x128xf32>
    %24 = vector.broadcast %3 : f32 to vector<8x128xf32>
    %25 = arith.addf %24, %23 : vector<8x128xf32>
    %26 = vector.broadcast %5 : f32 to vector<8x128xf32>
    %27 = arith.mulf %26, %13 : vector<8x128xf32>
    %28 = arith.addf %25, %27 : vector<8x128xf32>
    %29 = arith.mulf %28, %21 : vector<8x128xf32>
    %30 = vector.broadcast %7 : f32 to vector<8x128xf32>
    %31 = arith.mulf %30, %11 : vector<8x128xf32>
    %32 = vector.broadcast %6 : f32 to vector<8x128xf32>
    %33 = arith.addf %32, %31 : vector<8x128xf32>
    %34 = vector.broadcast %8 : f32 to vector<8x128xf32>
    %35 = arith.mulf %34, %13 : vector<8x128xf32>
    %36 = arith.addf %33, %35 : vector<8x128xf32>
    %37 = arith.mulf %36, %21 : vector<8x128xf32>
    %c0_6 = arith.constant 0 : index
    %c0_7 = arith.constant 0 : index
    %c0_8 = arith.constant 0 : index
    %38 = vector.load %arg5[%c0_6, %c0_7, %c0_8] : memref<3x8x128xf32, #tpu.memory_space<vmem>>, vector<1x8x128xf32>
    %39 = vector.shape_cast %38 : vector<1x8x128xf32> to vector<8x128xf32>
    %40 = vector.shape_cast %29 : vector<8x128xf32> to vector<1x8x128xf32>
    tpu.vector_store %arg5[%c0_6, %c0_7, %c0_8], %40 {strides = array<i32>} : memref<3x8x128xf32, #tpu.memory_space<vmem>>, vector<1x8x128xf32>,
    %c1_9 = arith.constant 1 : index
    %c0_10 = arith.constant 0 : index
    %c0_11 = arith.constant 0 : index
    %41 = vector.load %arg5[%c1_9, %c0_10, %c0_11] : memref<3x8x128xf32, #tpu.memory_space<vmem>>, vector<1x8x128xf32>
    %42 = vector.shape_cast %41 : vector<1x8x128xf32> to vector<8x128xf32>
    %43 = vector.shape_cast %37 : vector<8x128xf32> to vector<1x8x128xf32>
    tpu.vector_store %arg5[%c1_9, %c0_10, %c0_11], %43 {strides = array<i32>} : memref<3x8x128xf32, #tpu.memory_space<vmem>>, vector<1x8x128xf32>,
    %cst = arith.constant 0.000000e+00 : f32
    %44 = vector.broadcast %cst : f32 to vector<8x128xf32>
    %45 = vector.broadcast %9 : f32 to vector<8x128xf32>
    %46 = arith.addf %44, %45 : vector<8x128xf32>
    %c2_12 = arith.constant 2 : index
    %c0_13 = arith.constant 0 : index
    %c0_14 = arith.constant 0 : index
    %47 = vector.load %arg5[%c2_12, %c0_13, %c0_14] : memref<3x8x128xf32, #tpu.memory_space<vmem>>, vector<1x8x128xf32>
    %48 = vector.shape_cast %47 : vector<1x8x128xf32> to vector<8x128xf32>
    %49 = vector.shape_cast %46 : vector<8x128xf32> to vector<1x8x128xf32>
    tpu.vector_store %arg5[%c2_12, %c0_13, %c0_14], %49 {strides = array<i32>} : memref<3x8x128xf32, #tpu.memory_space<vmem>>, vector<1x8x128xf32>,
    %c0_15 = arith.constant 0 : index
    %c0_16 = arith.constant 0 : index
    %c0_17 = arith.constant 0 : index
    %50 = vector.load %arg3[%c0_15, %c0_16, %c0_17] : memref<3x8x128xf32, #tpu.memory_space<vmem>>, vector<1x8x128xf32>
    %51 = vector.shape_cast %50 : vector<1x8x128xf32> to vector<8x128xf32>
    %52 = arith.subf %29, %51 : vector<8x128xf32>
    %c1_18 = arith.constant 1 : index
    %c0_19 = arith.constant 0 : index
    %c0_20 = arith.constant 0 : index
    %53 = vector.load %arg3[%c1_18, %c0_19, %c0_20] : memref<3x8x128xf32, #tpu.memory_space<vmem>>, vector<1x8x128xf32>
    %54 = vector.shape_cast %53 : vector<1x8x128xf32> to vector<8x128xf32>
    %55 = arith.subf %37, %54 : vector<8x128xf32>
    %c2_21 = arith.constant 2 : index
    %c0_22 = arith.constant 0 : index
    %c0_23 = arith.constant 0 : index
    %56 = vector.load %arg3[%c2_21, %c0_22, %c0_23] : memref<3x8x128xf32, #tpu.memory_space<vmem>>, vector<1x8x128xf32>
    %57 = vector.shape_cast %56 : vector<1x8x128xf32> to vector<8x128xf32>
    %58 = vector.broadcast %9 : f32 to vector<8x128xf32>
    %59 = arith.subf %58, %57 : vector<8x128xf32>
    %60 = arith.mulf %52, %52 : vector<8x128xf32>
    %61 = arith.mulf %55, %55 : vector<8x128xf32>
    %62 = arith.addf %60, %61 : vector<8x128xf32>
    %63 = arith.mulf %59, %59 : vector<8x128xf32>
    %64 = arith.addf %62, %63 : vector<8x128xf32>
    %65 = math.sqrt %64 : vector<8x128xf32>
    %c0_24 = arith.constant 0 : index
    %c0_25 = arith.constant 0 : index
    %66 = vector.load %arg4[%c0_24, %c0_25] : memref<8x128xf32, #tpu.memory_space<vmem>>, vector<8x128xf32>
    tpu.vector_store %arg4[%c0_24, %c0_25], %65 {strides = array<i32>} : memref<8x128xf32, #tpu.memory_space<vmem>>, vector<8x128xf32>,
    return
  }
  func.func @transform_0(%arg0: i32, %arg1: memref<10xf32, #tpu.memory_space<smem>>) -> (i32, i32, i32) {
    %c0_i32 = arith.constant 0 : i32
    %c0_i32_0 = arith.constant 0 : i32
    %c0_i32_1 = arith.constant 0 : i32
    return %c0_i32, %arg0, %c0_i32_0 : i32, i32, i32
  }
  func.func @transform_1(%arg0: i32, %arg1: memref<10xf32, #tpu.memory_space<smem>>) -> (i32, i32, i32) {
    %c0_i32 = arith.constant 0 : i32
    %c0_i32_0 = arith.constant 0 : i32
    %c0_i32_1 = arith.constant 0 : i32
    return %c0_i32, %arg0, %c0_i32_0 : i32, i32, i32
  }
  func.func @transform_2(%arg0: i32, %arg1: memref<10xf32, #tpu.memory_space<smem>>) -> (i32, i32) {
    %c0_i32 = arith.constant 0 : i32
    %c0_i32_0 = arith.constant 0 : i32
    return %arg0, %c0_i32 : i32, i32
  }
  func.func @transform_3(%arg0: i32, %arg1: memref<10xf32, #tpu.memory_space<smem>>) -> (i32, i32, i32) {
    %c0_i32 = arith.constant 0 : i32
    %c0_i32_0 = arith.constant 0 : i32
    %c0_i32_1 = arith.constant 0 : i32
    return %c0_i32, %arg0, %c0_i32_0 : i32, i32, i32
  }
}

</mosaic_0001>

<llo_original>
// kernel: tpu_custom_call.1
$region0: #{tpu_custom_call.1}
  #allocation0 [shape = 'u32[]', space=smem, size = 0x4, offset = 0x4, fixed_abs, tag = 'smem constant byte address 0x4 - core index']
  #allocation1 [shape = 'u32[144,128]{1,0:T(1,128)}', space=vmem, size = 0x12000, scoped, tag = 'internal scratch']
  #allocation2 [shape = 's32[1]{0}', space=sflag, size = 0x4, scoped, tag = 'scoped memory for tpu_custom_call.1']
  #allocation3 [shape = 'u8[512]{0}', space=smem, size = 0x200, scoped, tag = 'prefetched SMEM operand 0']
  %s0 = inlined_call_operand.hbm [shape: f32[10], index: 0, kind: input, shape index: {}]
  %s1 = inlined_call_operand.hbm [shape: f32[2,8,128], index: 1, kind: input, shape index: {}]
  %s2 = inlined_call_operand.hbm [shape: f32[3,8,128], index: 2, kind: input, shape index: {}]
  %s3 = inlined_call_operand.hbm [shape: f32[8,128], index: 3, kind: output, shape index: {0}]
  %s4 = inlined_call_operand.hbm [shape: f32[3,8,128], index: 4, kind: output, shape index: {1}]
  %5 = xla_tuple %s3, %s4
  %s6 = sld [smem:[#allocation0]]
  $region34: #{tpu_custom_call.1} parent=0
    _
  %s8 = ssub.s32 1, %s6
  %s9 = scalar_select 0, %s8, %s6
  %11 = dma.hbm_to_smem %s0, 16, [#allocation3], [#allocation2]
  %12 = dma.done [#allocation2], 16
  %13 = sfence
  $region1: #{tpu_custom_call.1} parent=0
    #allocation4 [shape = 'u8[8192]{0}', space=vmem, size = 0x2000, scoped, tag = 'input window, operand 1, single buffered']
    #allocation5 [shape = 's32[1]{0}', space=sflag, size = 0x4, scoped, tag = 'scoped memory for tpu_custom_call.1']
    #allocation6 [shape = 's32[1]{0}', space=sflag, size = 0x4, scoped, tag = 'scoped memory for tpu_custom_call.1']
    #allocation7 [shape = 'u8[12288]{0}', space=vmem, size = 0x3000, scoped, tag = 'input window, operand 2, single buffered']
    #allocation8 [shape = 's32[1]{0}', space=sflag, size = 0x4, scoped, tag = 'scoped memory for tpu_custom_call.1']
    #allocation9 [shape = 'u8[4096]{0}', space=vmem, size = 0x1000, scoped, tag = 'output window, operand 0, single buffered']
    #allocation10 [shape = 'u8[12288]{0}', space=vmem, size = 0x3000, scoped, tag = 'output window, operand 1, single buffered']
    #allocation11 [shape = 's32[1]{0}', space=sflag, size = 0x4, scoped, tag = 'scoped memory for tpu_custom_call.1']
    %14 = vsyncpa [#allocation5], 0
    %15 = vsyncpa [#allocation8], 0
    %16 = vsyncpa [#allocation6], 0
    %17 = vsyncpa [#allocation11], 0
    // Predicated region
    $region2: #{tpu_custom_call.1} parent=1 // pred_check
      _
    $region3: #{tpu_custom_call.1} parent=1 // pred_check_branch
      %19 = sbr.rel (0) target = $region5
    $region4: #{tpu_custom_call.1} parent=1 // pred_region
      %s21 = ssub.s32 256, 256
      %22 = vsyncadd [#allocation5], %s21
      %s23 = sshll.u32 [#allocation4], 4
      %s24 = int_to_ptr.vmem [resolvable:$true] %s23
      %29 = dma.hbm_to_vmem [thread:$0]  %s1, 256, %s24, [#allocation5], 128, 128, 8
    $region5: #{tpu_custom_call.1} parent=1 // pred_fallthru
      _
    // Predicated region
    $region6: #{tpu_custom_call.1} parent=1 // pred_check
      _
    $region7: #{tpu_custom_call.1} parent=1 // pred_check_branch
      %31 = sbr.rel (0) target = $region9
    $region8: #{tpu_custom_call.1} parent=1 // pred_region
      %s33 = ssub.s32 384, 384
      %34 = vsyncadd [#allocation8], %s33
      %s35 = sshll.u32 [#allocation7], 4
      %s36 = int_to_ptr.vmem [resolvable:$true] %s35
      %41 = dma.hbm_to_vmem [thread:$0]  %s2, 384, %s36, [#allocation8], 128, 128, 8
    $region9: #{tpu_custom_call.1} parent=1 // pred_fallthru
      _
    // Predicated region
    $region10: #{tpu_custom_call.1} parent=1 // pred_check
      _
    $region11: #{tpu_custom_call.1} parent=1 // pred_check_branch
      %43 = sbr.rel (0) target = $region13
    $region12: #{tpu_custom_call.1} parent=1 // pred_region
      %44 = dma.done [#allocation5], 256
    $region13: #{tpu_custom_call.1} parent=1 // pred_fallthru
      _
    // Predicated region
    $region14: #{tpu_custom_call.1} parent=1 // pred_check
      _
    $region15: #{tpu_custom_call.1} parent=1 // pred_check_branch
      %46 = sbr.rel (0) target = $region17
    $region16: #{tpu_custom_call.1} parent=1 // pred_region
      %47 = dma.done [#allocation8], 384
    $region17: #{tpu_custom_call.1} parent=1 // pred_fallthru
      _
    %s48 = sld [smem:[#allocation3]]
    %s49 = sld [smem:[#allocation3 + $0x1]]
    %s50 = sld [smem:[#allocation3 + $0x2]]
    %s51 = sld [smem:[#allocation3 + $0x3]]
    %s52 = sld [smem:[#allocation3 + $0x4]]
    %s53 = sld [smem:[#allocation3 + $0x5]]
    %s54 = sld [smem:[#allocation3 + $0x6]]
    %s55 = sld [smem:[#allocation3 + $0x7]]
    %s56 = sld [smem:[#allocation3 + $0x8]]
    %s57 = sld [smem:[#allocation3 + $0x9]]
    %v58 = vld [vmem:[#allocation4] sm:$0xff]
    %s59 = scalar_lea.vmem [#allocation4], 8
    %v60 = vld [vmem:[%s59] sm:$0xff]
    %v61 = vstv %s49
    %v62 = vmul.f32 %v61, %v58
    %v63 = vstv %s48
    %v64 = vadd.f32 %v63, %v62
    %v65 = vstv %s50
    %v66 = vmul.f32 %v65, %v60
    %v67 = vadd.f32 %v64, %v66
    %v68 = vrcp.pop %v67
    %v69 = vstv %s52
    %v70 = vmul.f32 %v69, %v58
    %v71 = vstv %s51
    %v72 = vadd.f32 %v71, %v70
    %v73 = vstv %s53
    %v74 = vmul.f32 %v73, %v60
    %v75 = vadd.f32 %v72, %v74
    %v76 = vmul.f32 %v75, %v68
    %v77 = vstv %s55
    %v78 = vmul.f32 %v77, %v58
    %v79 = vstv %s54
    %v80 = vadd.f32 %v79, %v78
    %v81 = vstv %s56
    %v82 = vmul.f32 %v81, %v60
    %v83 = vadd.f32 %v80, %v82
    %v84 = vmul.f32 %v83, %v68
    %85 = vst [vmem:[#allocation10] sm:$0xff] %v76
    %s86 = scalar_lea.vmem [#allocation10], 8
    %87 = vst [vmem:[%s86] sm:$0xff] %v84
    %v88 = vstv %s57
    %v89 = vadd.f32 %v88, 0.0
    %s90 = scalar_lea.vmem [#allocation10], 16
    %91 = vst [vmem:[%s90] sm:$0xff] %v89
    %v92 = vld [vmem:[#allocation7] sm:$0xff]
    %v93 = vsub.f32 %v76, %v92
    %s94 = scalar_lea.vmem [#allocation7], 8
    %v95 = vld [vmem:[%s94] sm:$0xff]
    %v96 = vsub.f32 %v84, %v95
    %s97 = scalar_lea.vmem [#allocation7], 16
    %v98 = vld [vmem:[%s97] sm:$0xff]
    %v99 = vsub.f32 %v88, %v98
    %v100 = vmul.f32 %v93, %v93
    %v101 = vmul.f32 %v96, %v96
    %v102 = vadd.f32 %v100, %v101
    %v103 = vmul.f32 %v99, %v99
    %v104 = vadd.f32 %v102, %v103
    %v105 = vrsqrt.pop %v104
    %v106 = vmul.f32 %v104, %v105
    %vm107 = vcmp.eq.f32.partialorder %v104, inf
    %v108 = vsel %vm107, %v104, %v106
    %vm109 = vcmp.eq.f32.partialorder %v104, 0.0
    %v110 = vand.u32 %v104, 2147483648
    %v111 = vsel %vm109, %v110, %v108
    %112 = vst [vmem:[#allocation9] sm:$0xff] %v111
    // Predicated region
    $region18: #{tpu_custom_call.1} parent=1 // pred_check
      _
    $region19: #{tpu_custom_call.1} parent=1 // pred_check_branch
      %114 = sbr.rel (0) target = $region21
    $region20: #{tpu_custom_call.1} parent=1 // pred_region
      %s116 = ssub.s32 128, 128
      %117 = vsyncadd [#allocation6], %s116
      %s119 = sshll.u32 [#allocation9], 4
      %s120 = int_to_ptr.vmem [resolvable:$true] %s119
      %122 = dma.vmem_to_hbm [thread:$0]  %s120, 128, %s3, [#allocation6]
    $region21: #{tpu_custom_call.1} parent=1 // pred_fallthru
      _
    // Predicated region
    $region22: #{tpu_custom_call.1} parent=1 // pred_check
      _
    $region23: #{tpu_custom_call.1} parent=1 // pred_check_branch
      %124 = sbr.rel (0) target = $region25
    $region24: #{tpu_custom_call.1} parent=1 // pred_region
      %s126 = ssub.s32 384, 384
      %127 = vsyncadd [#allocation11], %s126
      %s128 = sshll.u32 [#allocation10], 4
      %s129 = int_to_ptr.vmem [resolvable:$true] %s128
      %134 = dma.vmem_to_hbm [thread:$0]  %s129, 384, %s4, [#allocation11], 128, 128, 8
    $region25: #{tpu_custom_call.1} parent=1 // pred_fallthru
      _
    // Predicated region
    $region26: #{tpu_custom_call.1} parent=1 // pred_check
      _
    $region27: #{tpu_custom_call.1} parent=1 // pred_check_branch
      %136 = sbr.rel (0) target = $region29
    $region28: #{tpu_custom_call.1} parent=1 // pred_region
      %137 = dma.done [#allocation6], 128
    $region29: #{tpu_custom_call.1} parent=1 // pred_fallthru
      _
    // Predicated region
    $region30: #{tpu_custom_call.1} parent=1 // pred_check
      _
    $region31: #{tpu_custom_call.1} parent=1 // pred_check_branch
      %139 = sbr.rel (0) target = $region33
    $region32: #{tpu_custom_call.1} parent=1 // pred_region
      %140 = dma.done [#allocation11], 384
    $region33: #{tpu_custom_call.1} parent=1 // pred_fallthru
      _
    %141 = vsyncpa [#allocation5], 1
    %142 = vsyncpa [#allocation8], 1
    %143 = vsyncpa [#allocation6], 1
    %144 = vsyncpa [#allocation11], 1

</llo_original>
